<compile_context>
chip_gen: v5e
topology: v5e:2x2
jax: 0.10.0
libtpu: 0.0.40
codegen_flags: <defaults>
</compile_context>

<pallas_src>
import functools

import jax
import jax.numpy as jnp
from jax.experimental import pallas as pl
from jax.experimental.pallas import tpu as pltpu

NEG_SLOPE = 0.01
EPS = 1e-5
# Keep per-kernel VMEM usage under the 32 MiB scoped default of every generation so no
# vmem_limit_bytes override is needed (v7x physical VMEM is only 64 MiB).  If the tile
# is ever pushed past this budget, raise it AND set
# pltpu.CompilerParams(vmem_limit_bytes=...) together.
_VMEM_BUDGET = 28 * 1024 * 1024


def _leaky_relu(v):
    return jnp.where(v > 0, v, NEG_SLOPE * v)


def _round_up(x, m):
    return ((x + m - 1) // m) * m


def prepare_mfcfc_params(w1, w2, w3):
    """Fold the InstanceNorm centering into fc2/fc3 weights.  Call ONCE, not per step.

    All weights are (in_features, out_features), i.e. the transpose of nn.Linear.weight.
    Since (h - mean_row(h)) @ w == h @ (w - column_mean(w)), centering the weights here
    makes the in-kernel centering free.
    """
    w2c = w2 - jnp.mean(w2, axis=0, keepdims=True)
    w3c = w3 - jnp.mean(w3, axis=0, keepdims=True)
    return w1, w2c, w3c


def mfcfc_kernel(x_ref, w1_ref, w2c_ref, w3c_ref, y_ref, z_ref, *, precision):
    # x_ref: (tm, c_in) row tile (streamed); w1_ref: (c_in, c_in);
    # w2c_ref / w3c_ref: (c_in, bottleneck) with the norm centering pre-folded.
    x = x_ref[...]

    # fc1 + LeakyReLU, f32 accumulation (norm math stays f32: v5e VPU/EUP lack bf16).
    h = jnp.dot(x, w1_ref[...], preferred_element_type=jnp.float32,
                precision=precision)
    h = _leaky_relu(h)

    # InstanceNorm statistics over the trailing c_in axis (biased variance, eps=1e-5).
    # These two 32-lane reductions are the only cross-lane (XLU) work left; if a bundle
    # dump shows the XLU as the binding slot (most plausible on v7x), they can be moved
    # onto the idle MXU as broadcast-matmuls against a (c_in, bottleneck) 1/c_in matrix.
    mean = jnp.mean(h, axis=-1, keepdims=True)
    meansq = jnp.mean(h * h, axis=-1, keepdims=True)
    inv_std = jax.lax.rsqrt(meansq - mean * mean + EPS)          # (tm, 1)

    # fc2 / fc3 on the *uncentered* h (centering lives in w2c/w3c).  The 1/std scale
    # and LeakyReLU run on the lane-dense (tm, bottleneck) results, not on a (tm, c_in)
    # normalized tensor.
    hm = h.astype(w2c_ref.dtype)
    sy = jnp.dot(hm, w2c_ref[...], preferred_element_type=jnp.float32,
                 precision=precision)
    sz = jnp.dot(hm, w3c_ref[...], preferred_element_type=jnp.float32,
                 precision=precision)
    y_ref[...] = _leaky_relu(sy * inv_std).astype(y_ref.dtype)
    z_ref[...] = _leaky_relu(sz * inv_std).astype(z_ref.dtype)


def _choose_row_tile(M, c_in, bottleneck, x_bytes, w_bytes, o_bytes, sublane):
    """Pick the row tile: as large as the VMEM budget allows (amortizes the ~0.35 us
    per-step pipeline overhead), capped at 4096 rows; for large M use >=8 grid steps
    with an even count so v7x's 2 TensorCores get a balanced split and >=4 steps/core
    of DMA/compute overlap."""
    # Per-row VMEM bytes: double-buffered x tile, double-buffered y/z tiles, plus f32
    # compute temporaries (h, h*h, the two pre-activation tiles and their epilogues).
    per_row = (2 * c_in * x_bytes
               + 2 * 2 * bottleneck * o_bytes
               + 4 * (2 * c_in + 4 * bottleneck))
    # Grid-invariant weights (double-buffered by the default pipeline; they are tiny --
    # a few hundred KiB -- so pipeline_mode=pl.Buffered(1) is not worth the knob here).
    weight_bytes = 2 * (c_in * c_in + 2 * c_in * bottleneck) * w_bytes
    tm_vmem = max(sublane, (_VMEM_BUDGET - weight_bytes) // max(per_row, 1))
    tm_cap = min(4096, tm_vmem)
    if M <= tm_cap:
        # Single step whose block equals the full array: no padding or masking at all.
        return M
    n_steps = max(8, pl.cdiv(M, tm_cap))
    n_steps += n_steps % 2            # even step count -> balanced v7x 2-TC split
    return _round_up(pl.cdiv(M, n_steps), sublane)


def mfcfc_forward(x, w1, w2c, w3c, *, out_dtype=None, tm=None):
    """x: (B, S, c_in).  w1: (c_in, c_in); w2c / w3c: (c_in, bottleneck) as returned by
    prepare_mfcfc_params (centering folded in).  Weights are (in, out) layout, i.e. the
    transpose of nn.Linear.weight.  Returns (y, z), each (B, S, bottleneck)."""
    B, S, c_in = x.shape
    bottleneck = w2c.shape[1]
    M = B * S
    out_dtype = x.dtype if out_dtype is None else out_dtype

    x2d = x.reshape(M, c_in)
    sublane = 8 if jnp.dtype(x.dtype).itemsize == 4 else 16
    if tm is None:
        tm = _choose_row_tile(M, c_in, bottleneck,
                              jnp.dtype(x.dtype).itemsize,
                              jnp.dtype(w1.dtype).itemsize,
                              jnp.dtype(out_dtype).itemsize,
                              sublane)
    num_tiles = pl.cdiv(M, tm)

    # f32 inputs get f32-accurate (multi-pass) matmuls -- the MXU is idle at K=32, so
    # this is free and matches PyTorch f32 numerics.  bf16 inputs run native bf16.
    precision = (jax.lax.Precision.HIGHEST
                 if x.dtype == jnp.float32 else jax.lax.Precision.DEFAULT)
    kernel = functools.partial(mfcfc_kernel, precision=precision)

    y2d, z2d = pl.pallas_call(
        kernel,
        out_shape=(jax.ShapeDtypeStruct((M, bottleneck), out_dtype),
                   jax.ShapeDtypeStruct((M, bottleneck), out_dtype)),
        grid_spec=pl.GridSpec(
            grid=(num_tiles,),
            in_specs=[
                pl.BlockSpec((tm, c_in), lambda i: (i, 0)),        # x rows (streamed)
                pl.BlockSpec((c_in, c_in), lambda i: (0, 0)),      # W1 (grid-invariant)
                pl.BlockSpec((c_in, bottleneck), lambda i: (0, 0)),  # W2 centered
                pl.BlockSpec((c_in, bottleneck), lambda i: (0, 0)),  # W3 centered
            ],
            out_specs=(
                pl.BlockSpec((tm, bottleneck), lambda i: (i, 0)),  # y rows
                pl.BlockSpec((tm, bottleneck), lambda i: (i, 0)),  # z rows
            ),
        ),
        compiler_params=pltpu.CompilerParams(
            dimension_semantics=("parallel",),   # rows independent -> v7x TC sharding
        ),
    )(x2d, w1, w2c, w3c)

    return (y2d.reshape(B, S, bottleneck), z2d.reshape(B, S, bottleneck))


def mfcfc_reference(x, w1, w2, w3):
    """Pure-JAX reference mirroring the PyTorch module (takes the UNfused weights)."""
    hp = jax.lax.Precision.HIGHEST
    f = jnp.float32
    h = _leaky_relu(jnp.dot(x.astype(f), w1.astype(f), precision=hp))
    mean = jnp.mean(h, axis=-1, keepdims=True)
    var = jnp.mean((h - mean) ** 2, axis=-1, keepdims=True)
    hn = (h - mean) / jnp.sqrt(var + EPS)
    y = _leaky_relu(jnp.dot(hn, w2.astype(f), precision=hp))
    z = _leaky_relu(jnp.dot(hn, w3.astype(f), precision=hp))
    return y.astype(x.dtype), z.astype(x.dtype)


if __name__ == "__main__":
    # Small shapes consistent with the module: batch=2, seq=8, c_in=32, bottleneck=64.
    B, S, c_in, bottleneck = 2, 8, 32, 64

    key = jax.random.PRNGKey(0)
    kx, k1, k2, k3, kb = jax.random.split(key, 5)

    x = jax.random.normal(kx, (B, S, c_in), dtype=jnp.float32)

    # Deterministic weights (Kaiming-uniform-like scale), stored as (in, out), i.e. the
    # transpose of PyTorch's nn.Linear weight layout (out, in).
    bound = 1.0 / (c_in ** 0.5)
    w1 = jax.random.uniform(k1, (c_in, c_in), jnp.float32, -bound, bound)
    w2 = jax.random.uniform(k2, (c_in, bottleneck), jnp.float32, -bound, bound)
    w3 = jax.random.uniform(k3, (c_in, bottleneck), jnp.float32, -bound, bound)

    # Fold the InstanceNorm centering into fc2/fc3 once, off the per-call path.
    p_w1, p_w2c, p_w3c = prepare_mfcfc_params(w1, w2, w3)

    y, z = mfcfc_forward(x, p_w1, p_w2c, p_w3c)
    jax.block_until_ready((y, z))

    y_ref, z_ref = mfcfc_reference(x, w1, w2, w3)
    assert y.shape == (B, S, bottleneck) and z.shape == (B, S, bottleneck)
    assert jnp.allclose(y, y_ref, atol=1e-4, rtol=1e-4)
    assert jnp.allclose(z, z_ref, atol=1e-4, rtol=1e-4)

    # Ragged row count (M = 15): a single block equal to the full (unpadded) array.
    xr = jax.random.normal(kx, (3, 5, c_in), dtype=jnp.float32)
    yr, zr = mfcfc_forward(xr, p_w1, p_w2c, p_w3c)
    jax.block_until_ready((yr, zr))
    yr_ref, zr_ref = mfcfc_reference(xr, w1, w2, w3)
    assert jnp.allclose(yr, yr_ref, atol=1e-4, rtol=1e-4)
    assert jnp.allclose(zr, zr_ref, atol=1e-4, rtol=1e-4)

    # Larger input exercising the multi-step grid and the masked ragged last row-block.
    xb = jax.random.normal(kb, (3, 1500, c_in), dtype=jnp.float32)
    yb, zb = mfcfc_forward(xb, p_w1, p_w2c, p_w3c)
    jax.block_until_ready((yb, zb))
    yb_ref, zb_ref = mfcfc_reference(xb, w1, w2, w3)
    assert jnp.allclose(yb, yb_ref, atol=1e-4, rtol=1e-4)
    assert jnp.allclose(zb, zb_ref, atol=1e-4, rtol=1e-4)

    print("KERNEL_OK")
</pallas_src>

<mosaic_0001>
module attributes {stable_mosaic.version = 11 : i64} {
  func.func @mfcfc_kernel(%arg0: i32, %arg1: memref<16x32xf32, #tpu.memory_space<vmem>>, %arg2: memref<32x32xf32, #tpu.memory_space<vmem>>, %arg3: memref<32x64xf32, #tpu.memory_space<vmem>>, %arg4: memref<32x64xf32, #tpu.memory_space<vmem>>, %arg5: memref<16x64xf32, #tpu.memory_space<vmem>>, %arg6: memref<16x64xf32, #tpu.memory_space<vmem>>) attributes {dimension_semantics = [#tpu.dimension_semantics<parallel>], iteration_bounds = array<i64: 1>, scalar_prefetch = 0 : i64, scratch_operands = 0 : i64, tpu.core_type = #tpu.core_type<tc>, window_params = [{transform_indices = @transform_0, window_bounds = array<i64: 16, 32>}, {pipeline_mode = #tpu.pipeline_mode<synchronous>, transform_indices = @transform_1, window_bounds = array<i64: 32, 32>}, {pipeline_mode = #tpu.pipeline_mode<synchronous>, transform_indices = @transform_2, window_bounds = array<i64: 32, 64>}, {pipeline_mode = #tpu.pipeline_mode<synchronous>, transform_indices = @transform_3, window_bounds = array<i64: 32, 64>}, {transform_indices = @transform_4, window_bounds = array<i64: 16, 64>}, {transform_indices = @transform_5, window_bounds = array<i64: 16, 64>}]} {
    %c0 = arith.constant 0 : index
    %c0_0 = arith.constant 0 : index
    %0 = vector.load %arg1[%c0, %c0_0] : memref<16x32xf32, #tpu.memory_space<vmem>>, vector<16x32xf32>
    %c0_1 = arith.constant 0 : index
    %c0_2 = arith.constant 0 : index
    %1 = vector.load %arg2[%c0_1, %c0_2] : memref<32x32xf32, #tpu.memory_space<vmem>>, vector<32x32xf32>
    %cst = arith.constant dense<0.000000e+00> : vector<16x32xf32>
    %2 = tpu.matmul %0, %1, %cst {dimension_numbers = #tpu.dot_dimension_numbers<[1], [0], [0], [1], [0, 0, 1, 1], [], []>, precision = #tpu.contract_precision<fp32>} : vector<16x32xf32>, vector<32x32xf32>, vector<16x32xf32> -> vector<16x32xf32>
    %cst_3 = arith.constant 0.000000e+00 : f32
    %3 = vector.broadcast %cst_3 : f32 to vector<16x32xf32>
    %4 = arith.cmpf ogt, %2, %3 : vector<16x32xf32>
    %cst_4 = arith.constant 0.00999999977 : f32
    %5 = vector.broadcast %cst_4 : f32 to vector<16x32xf32>
    %6 = arith.mulf %5, %2 : vector<16x32xf32>
    %7 = arith.select %4, %2, %6 : vector<16x32xi1>, vector<16x32xf32>
    %cst_5 = arith.constant dense<0.000000e+00> : vector<16xf32>
    %8 = vector.multi_reduction <add>, %7, %cst_5 [1] : vector<16x32xf32> to vector<16xf32>
    %9 = vector.shape_cast %8 : vector<16xf32> to vector<16x1xf32>
    %cst_6 = arith.constant 3.200000e+01 : f32
    %10 = vector.broadcast %cst_6 : f32 to vector<16x1xf32>
    %11 = arith.divf %9, %10 : vector<16x1xf32>
    %12 = arith.mulf %7, %7 : vector<16x32xf32>
    %cst_7 = arith.constant dense<0.000000e+00> : vector<16xf32>
    %13 = vector.multi_reduction <add>, %12, %cst_7 [1] : vector<16x32xf32> to vector<16xf32>
    %14 = vector.shape_cast %13 : vector<16xf32> to vector<16x1xf32>
    %cst_8 = arith.constant 3.200000e+01 : f32
    %15 = vector.broadcast %cst_8 : f32 to vector<16x1xf32>
    %16 = arith.divf %14, %15 : vector<16x1xf32>
    %17 = arith.mulf %11, %11 : vector<16x1xf32>
    %18 = arith.subf %16, %17 : vector<16x1xf32>
    %cst_9 = arith.constant 9.99999974E-6 : f32
    %19 = vector.broadcast %cst_9 : f32 to vector<16x1xf32>
    %20 = arith.addf %18, %19 : vector<16x1xf32>
    %21 = math.rsqrt %20 : vector<16x1xf32>
    %c0_10 = arith.constant 0 : index
    %c0_11 = arith.constant 0 : index
    %22 = vector.load %arg3[%c0_10, %c0_11] : memref<32x64xf32, #tpu.memory_space<vmem>>, vector<32x64xf32>
    %cst_12 = arith.constant dense<0.000000e+00> : vector<16x64xf32>
    %23 = tpu.matmul %7, %22, %cst_12 {dimension_numbers = #tpu.dot_dimension_numbers<[1], [0], [0], [1], [0, 0, 1, 1], [], []>, precision = #tpu.contract_precision<fp32>} : vector<16x32xf32>, vector<32x64xf32>, vector<16x64xf32> -> vector<16x64xf32>
    %c0_13 = arith.constant 0 : index
    %c0_14 = arith.constant 0 : index
    %24 = vector.load %arg4[%c0_13, %c0_14] : memref<32x64xf32, #tpu.memory_space<vmem>>, vector<32x64xf32>
    %cst_15 = arith.constant dense<0.000000e+00> : vector<16x64xf32>
    %25 = tpu.matmul %7, %24, %cst_15 {dimension_numbers = #tpu.dot_dimension_numbers<[1], [0], [0], [1], [0, 0, 1, 1], [], []>, precision = #tpu.contract_precision<fp32>} : vector<16x32xf32>, vector<32x64xf32>, vector<16x64xf32> -> vector<16x64xf32>
    %26 = vector.broadcast %21 : vector<16x1xf32> to vector<16x64xf32>
    %27 = arith.mulf %23, %26 : vector<16x64xf32>
    %cst_16 = arith.constant 0.000000e+00 : f32
    %28 = vector.broadcast %cst_16 : f32 to vector<16x64xf32>
    %29 = arith.cmpf ogt, %27, %28 : vector<16x64xf32>
    %cst_17 = arith.constant 0.00999999977 : f32
    %30 = vector.broadcast %cst_17 : f32 to vector<16x64xf32>
    %31 = arith.mulf %30, %27 : vector<16x64xf32>
    %32 = arith.select %29, %27, %31 : vector<16x64xi1>, vector<16x64xf32>
    %c0_18 = arith.constant 0 : index
    %c0_19 = arith.constant 0 : index
    %33 = vector.load %arg5[%c0_18, %c0_19] : memref<16x64xf32, #tpu.memory_space<vmem>>, vector<16x64xf32>
    tpu.vector_store %arg5[%c0_18, %c0_19], %32 {strides = array<i32>} : memref<16x64xf32, #tpu.memory_space<vmem>>, vector<16x64xf32>,
    %34 = vector.broadcast %21 : vector<16x1xf32> to vector<16x64xf32>
    %35 = arith.mulf %25, %34 : vector<16x64xf32>
    %cst_20 = arith.constant 0.000000e+00 : f32
    %36 = vector.broadcast %cst_20 : f32 to vector<16x64xf32>
    %37 = arith.cmpf ogt, %35, %36 : vector<16x64xf32>
    %cst_21 = arith.constant 0.00999999977 : f32
    %38 = vector.broadcast %cst_21 : f32 to vector<16x64xf32>
    %39 = arith.mulf %38, %35 : vector<16x64xf32>
    %40 = arith.select %37, %35, %39 : vector<16x64xi1>, vector<16x64xf32>
    %c0_22 = arith.constant 0 : index
    %c0_23 = arith.constant 0 : index
    %41 = vector.load %arg6[%c0_22, %c0_23] : memref<16x64xf32, #tpu.memory_space<vmem>>, vector<16x64xf32>
    tpu.vector_store %arg6[%c0_22, %c0_23], %40 {strides = array<i32>} : memref<16x64xf32, #tpu.memory_space<vmem>>, vector<16x64xf32>,
    return
  }
  func.func @transform_0(%arg0: i32) -> (i32, i32) {
    %c0_i32 = arith.constant 0 : i32
    %c0_i32_0 = arith.constant 0 : i32
    return %arg0, %c0_i32 : i32, i32
  }
  func.func @transform_1(%arg0: i32) -> (i32, i32) {
    %c0_i32 = arith.constant 0 : i32
    %c0_i32_0 = arith.constant 0 : i32
    %c0_i32_1 = arith.constant 0 : i32
    return %c0_i32, %c0_i32_0 : i32, i32
  }
  func.func @transform_2(%arg0: i32) -> (i32, i32) {
    %c0_i32 = arith.constant 0 : i32
    %c0_i32_0 = arith.constant 0 : i32
    %c0_i32_1 = arith.constant 0 : i32
    return %c0_i32, %c0_i32_0 : i32, i32
  }
  func.func @transform_3(%arg0: i32) -> (i32, i32) {
    %c0_i32 = arith.constant 0 : i32
    %c0_i32_0 = arith.constant 0 : i32
    %c0_i32_1 = arith.constant 0 : i32
    return %c0_i32, %c0_i32_0 : i32, i32
  }
  func.func @transform_4(%arg0: i32) -> (i32, i32) {
    %c0_i32 = arith.constant 0 : i32
    %c0_i32_0 = arith.constant 0 : i32
    return %arg0, %c0_i32 : i32, i32
  }
  func.func @transform_5(%arg0: i32) -> (i32, i32) {
    %c0_i32 = arith.constant 0 : i32
    %c0_i32_0 = arith.constant 0 : i32
    return %arg0, %c0_i32 : i32, i32
  }
}

</mosaic_0001>

<llo_original>
// kernel: tpu_custom_call.1
$region0: #{tpu_custom_call.1}
  #allocation0 [shape = 'u32[]', space=smem, size = 0x4, offset = 0x4, fixed_abs, tag = 'smem constant byte address 0x4 - core index']
  #allocation1 [shape = 'u32[72,128]{1,0:T(1,128)}', space=vmem, size = 0x9000, scoped, tag = 'internal scratch']
  %s0 = inlined_call_operand.hbm [shape: f32[16,32], index: 0, kind: input, shape index: {}]
  %s1 = inlined_call_operand.hbm [shape: f32[32,32], index: 1, kind: input, shape index: {}]
  %s2 = inlined_call_operand.hbm [shape: f32[32,64], index: 2, kind: input, shape index: {}]
  %s3 = inlined_call_operand.hbm [shape: f32[32,64], index: 3, kind: input, shape index: {}]
  %s4 = inlined_call_operand.hbm [shape: f32[16,64], index: 4, kind: output, shape index: {0}]
  %s5 = inlined_call_operand.hbm [shape: f32[16,64], index: 5, kind: output, shape index: {1}]
  %6 = xla_tuple %s4, %s5
  %s7 = sld [smem:[#allocation0]]
  $region50: #{tpu_custom_call.1} parent=0
    _
  %s9 = ssub.s32 1, %s7
  %s10 = scalar_select 0, %s9, %s7
  $region1: #{tpu_custom_call.1} parent=0
    #allocation2 [shape = 'u8[8192]{0}', space=vmem, size = 0x2000, scoped, tag = 'input window, operand 0, single buffered']
    #allocation3 [shape = 's32[1]{0}', space=sflag, size = 0x4, scoped, tag = 'scoped memory for tpu_custom_call.1']
    #allocation4 [shape = 's32[1]{0}', space=sflag, size = 0x4, scoped, tag = 'scoped memory for tpu_custom_call.1']
    #allocation5 [shape = 'u8[16384]{0}', space=vmem, size = 0x4000, scoped, tag = 'input window, operand 1, single buffered']
    #allocation6 [shape = 's32[1]{0}', space=sflag, size = 0x4, scoped, tag = 'scoped memory for tpu_custom_call.1']
    #allocation7 [shape = 'u8[16384]{0}', space=vmem, size = 0x4000, scoped, tag = 'input window, operand 2, single buffered']
    #allocation8 [shape = 'u8[16384]{0}', space=vmem, size = 0x4000, scoped, tag = 'input window, operand 3, single buffered']
    #allocation9 [shape = 's32[1]{0}', space=sflag, size = 0x4, scoped, tag = 'scoped memory for tpu_custom_call.1']
    #allocation10 [shape = 'u8[8192]{0}', space=vmem, size = 0x2000, scoped, tag = 'output window, operand 0, single buffered']
    #allocation11 [shape = 'u8[8192]{0}', space=vmem, size = 0x2000, scoped, tag = 'output window, operand 1, single buffered']
    #allocation12 [shape = 's32[1]{0}', space=sflag, size = 0x4, scoped, tag = 'scoped memory for tpu_custom_call.1']
    %11 = vsyncpa [#allocation3], 0
    %12 = vsyncpa [#allocation6], 0
    %13 = vsyncpa [#allocation9], 0
    %14 = vsyncpa [#allocation4], 0
    %15 = vsyncpa [#allocation12], 0
    // Predicated region
    $region2: #{tpu_custom_call.1} parent=1 // pred_check
      _
    $region3: #{tpu_custom_call.1} parent=1 // pred_check_branch
      %17 = sbr.rel (0) target = $region5
    $region4: #{tpu_custom_call.1} parent=1 // pred_region
      %19 = vsyncadd [#allocation3], 0
      %s20 = sshll.u32 %s0, 4
      %s21 = int_to_ptr.hbm [resolvable:$true] %s20
      %s22 = sshll.u32 [#allocation2], 4
      %s23 = int_to_ptr.vmem [resolvable:$true] %s22
      %28 = dma.hbm_to_vmem [thread:$0]  %s21, 256, %s23, [#allocation3], 128, 128, 8
    $region5: #{tpu_custom_call.1} parent=1 // pred_fallthru
      _
    // Predicated region
    $region6: #{tpu_custom_call.1} parent=1 // pred_check
      _
    $region7: #{tpu_custom_call.1} parent=1 // pred_check_branch
      %30 = sbr.rel (0) target = $region9
    $region8: #{tpu_custom_call.1} parent=1 // pred_region
      %32 = vsyncadd [#allocation6], 0
      %s33 = sshll.u32 %s1, 4
      %s34 = int_to_ptr.hbm [resolvable:$true] %s33
      %s35 = sshll.u32 [#allocation5], 4
      %s36 = int_to_ptr.vmem [resolvable:$true] %s35
      %41 = dma.hbm_to_vmem [thread:$0]  %s34, 512, %s36, [#allocation6], 128, 128, 8
    $region9: #{tpu_custom_call.1} parent=1 // pred_fallthru
      _
    // Predicated region
    $region10: #{tpu_custom_call.1} parent=1 // pred_check
      _
    $region11: #{tpu_custom_call.1} parent=1 // pred_check_branch
      %43 = sbr.rel (0) target = $region13
    $region12: #{tpu_custom_call.1} parent=1 // pred_region
      %45 = vsyncadd [#allocation6], 0
      %s46 = sshll.u32 %s2, 4
      %s47 = int_to_ptr.hbm [resolvable:$true] %s46
      %s48 = sshll.u32 [#allocation7], 4
      %s49 = int_to_ptr.vmem [resolvable:$true] %s48
      %54 = dma.hbm_to_vmem [thread:$0]  %s47, 512, %s49, [#allocation6], 128, 128, 8
    $region13: #{tpu_custom_call.1} parent=1 // pred_fallthru
      _
    // Predicated region
    $region14: #{tpu_custom_call.1} parent=1 // pred_check
      _
    $region15: #{tpu_custom_call.1} parent=1 // pred_check_branch
      %56 = sbr.rel (0) target = $region17
    $region16: #{tpu_custom_call.1} parent=1 // pred_region
      %58 = vsyncadd [#allocation9], 0
      %s59 = sshll.u32 %s3, 4
      %s60 = int_to_ptr.hbm [resolvable:$true] %s59
      %s61 = sshll.u32 [#allocation8], 4
      %s62 = int_to_ptr.vmem [resolvable:$true] %s61
      %67 = dma.hbm_to_vmem [thread:$0]  %s60, 512, %s62, [#allocation9], 128, 128, 8
    $region17: #{tpu_custom_call.1} parent=1 // pred_fallthru
      _
    // Predicated region
    $region18: #{tpu_custom_call.1} parent=1 // pred_check
      _
    $region19: #{tpu_custom_call.1} parent=1 // pred_check_branch
      %69 = sbr.rel (0) target = $region21
    $region20: #{tpu_custom_call.1} parent=1 // pred_region
      %71 = dma.done [#allocation3], 256
    $region21: #{tpu_custom_call.1} parent=1 // pred_fallthru
      _
    // Predicated region
    $region22: #{tpu_custom_call.1} parent=1 // pred_check
      _
    $region23: #{tpu_custom_call.1} parent=1 // pred_check_branch
      %73 = sbr.rel (0) target = $region25
    $region24: #{tpu_custom_call.1} parent=1 // pred_region
      %75 = dma.done [#allocation6], 512
    $region25: #{tpu_custom_call.1} parent=1 // pred_fallthru
      _
    // Predicated region
    $region26: #{tpu_custom_call.1} parent=1 // pred_check
      _
    $region27: #{tpu_custom_call.1} parent=1 // pred_check_branch
      %77 = sbr.rel (0) target = $region29
    $region28: #{tpu_custom_call.1} parent=1 // pred_region
      %79 = dma.done [#allocation6], 512
    $region29: #{tpu_custom_call.1} parent=1 // pred_fallthru
      _
    // Predicated region
    $region30: #{tpu_custom_call.1} parent=1 // pred_check
      _
    $region31: #{tpu_custom_call.1} parent=1 // pred_check_branch
      %81 = sbr.rel (0) target = $region33
    $region32: #{tpu_custom_call.1} parent=1 // pred_region
      %83 = dma.done [#allocation9], 512
    $region33: #{tpu_custom_call.1} parent=1 // pred_fallthru
      _
    %v84 = vld [vmem:[#allocation2] sm:$0xff]
    %v85 = vld [vmem:[#allocation2 + $0x8] sm:$0xff]
    %v86 = vld [vmem:[#allocation5] sm:$0xff]
    %v87 = vld [vmem:[#allocation5 + $0x8] sm:$0xff]
    %v88 = vld [vmem:[#allocation5 + $0x10] sm:$0xff]
    %v89 = vld [vmem:[#allocation5 + $0x18] sm:$0xff]
    %vm90 = vcmask 261120
    %v92 = vsel %vm90, %v84, 0
    %v95 = vsel %vm90, %v85, 0
    %97 = vmatpush.msra.mxu0 0.0
    %98 = vmatpush.msra.mxu0 0.0
    %99 = vmatpush.msra.mxu0 0.0
    %100 = vmatpush.msra.mxu0 0.0
    %101 = vmatpush.msra.mxu0 0.0
    %102 = vmatpush.msra.mxu0 0.0
    %103 = vmatpush.msra.mxu0 0.0
    %104 = vmatpush.msra.mxu0 0.0
    %105 = vmatpush.msra.mxu0 0.0
    %106 = vmatpush.msra.mxu0 0.0
    %107 = vmatpush.msra.mxu0 0.0
    %108 = vmatpush.msra.mxu0 0.0
    %v109 = vand.u32 %v89, 4294901760
    %110 = vmatpush.msra.mxu0 %v109
    %v111 = vand.u32 %v88, 4294901760
    %112 = vmatpush.msra.mxu0 %v111
    %v113 = vand.u32 %v87, 4294901760
    %114 = vmatpush.msra.mxu0 %v113
    %v115 = vand.u32 %v86, 4294901760
    %116 = vmatpush.msra.mxu0 %v115
    %v117 = vand.u32 %v92, 4294901760
    %v118 = vsub.f32 %v92, %v117
    %v119 = vand.u32 %v118, 4294901760
    %v120 = vsub.f32 %v118, %v119
    %v121 = vand.u32 %v120, 4294901760
    %122 = vmatmul.f32.gmra.mxu0 %v121
    %v123 = vpop.f32.mrf.mxu0
    %v124 = vadd.f32 0.0, %v123
    %v125 = vand.u32 %v95, 4294901760
    %v126 = vsub.f32 %v95, %v125
    %v127 = vand.u32 %v126, 4294901760
    %v128 = vsub.f32 %v126, %v127
    %v129 = vand.u32 %v128, 4294901760
    %130 = vmatmul.f32.gmra.mxu0 %v129
    %v131 = vpop.f32.mrf.mxu0
    %v132 = vadd.f32 0.0, %v131
    %133 = vdwg.mxu0
    %134 = vmatpush.msra.mxu0 0.0
    %135 = vmatpush.msra.mxu0 0.0
    %136 = vmatpush.msra.mxu0 0.0
    %137 = vmatpush.msra.mxu0 0.0
    %138 = vmatpush.msra.mxu0 0.0
    %139 = vmatpush.msra.mxu0 0.0
    %140 = vmatpush.msra.mxu0 0.0
    %141 = vmatpush.msra.mxu0 0.0
    %142 = vmatpush.msra.mxu0 0.0
    %143 = vmatpush.msra.mxu0 0.0
    %144 = vmatpush.msra.mxu0 0.0
    %145 = vmatpush.msra.mxu0 0.0
    %v146 = vand.u32 %v89, 4294901760
    %v147 = vsub.f32 %v89, %v146
    %v148 = vand.u32 %v147, 4294901760
    %v149 = vsub.f32 %v147, %v148
    %v150 = vand.u32 %v149, 4294901760
    %151 = vmatpush.msra.mxu0 %v150
    %v152 = vand.u32 %v88, 4294901760
    %v153 = vsub.f32 %v88, %v152
    %v154 = vand.u32 %v153, 4294901760
    %v155 = vsub.f32 %v153, %v154
    %v156 = vand.u32 %v155, 4294901760
    %157 = vmatpush.msra.mxu0 %v156
    %v158 = vand.u32 %v87, 4294901760
    %v159 = vsub.f32 %v87, %v158
    %v160 = vand.u32 %v159, 4294901760
    %v161 = vsub.f32 %v159, %v160
    %v162 = vand.u32 %v161, 4294901760
    %163 = vmatpush.msra.mxu0 %v162
    %v164 = vand.u32 %v86, 4294901760
    %v165 = vsub.f32 %v86, %v164
    %v166 = vand.u32 %v165, 4294901760
    %v167 = vsub.f32 %v165, %v166
    %v168 = vand.u32 %v167, 4294901760
    %169 = vmatpush.msra.mxu0 %v168
    %v170 = vand.u32 %v92, 4294901760
    %171 = vmatmul.f32.gmra.mxu0 %v170
    %v172 = vpop.f32.mrf.mxu0
    %v173 = vadd.f32 %v124, %v172
    %v174 = vand.u32 %v95, 4294901760
    %175 = vmatmul.f32.gmra.mxu0 %v174
    %v176 = vpop.f32.mrf.mxu0
    %v177 = vadd.f32 %v132, %v176
    %178 = vdwg.mxu0
    %179 = vmatpush.msra.mxu0 0.0
    %180 = vmatpush.msra.mxu0 0.0
    %181 = vmatpush.msra.mxu0 0.0
    %182 = vmatpush.msra.mxu0 0.0
    %183 = vmatpush.msra.mxu0 0.0
    %184 = vmatpush.msra.mxu0 0.0
    %185 = vmatpush.msra.mxu0 0.0
    %186 = vmatpush.msra.mxu0 0.0
    %187 = vmatpush.msra.mxu0 0.0
    %188 = vmatpush.msra.mxu0 0.0
    %189 = vmatpush.msra.mxu0 0.0
    %190 = vmatpush.msra.mxu0 0.0
    %v191 = vand.u32 %v89, 4294901760
    %v192 = vsub.f32 %v89, %v191
    %193 = vmatpush.msra.mxu0 %v192
    %v194 = vand.u32 %v88, 4294901760
    %v195 = vsub.f32 %v88, %v194
    %196 = vmatpush.msra.mxu0 %v195
    %v197 = vand.u32 %v87, 4294901760
    %v198 = vsub.f32 %v87, %v197
    %199 = vmatpush.msra.mxu0 %v198
    %v200 = vand.u32 %v86, 4294901760
    %v201 = vsub.f32 %v86, %v200
    %202 = vmatpush.msra.mxu0 %v201
    %v203 = vand.u32 %v92, 4294901760
    %v204 = vsub.f32 %v92, %v203
    %205 = vmatmul.f32.gmra.mxu0 %v204
    %v206 = vpop.f32.mrf.mxu0
    %v207 = vadd.f32 %v173, %v206
    %v208 = vand.u32 %v95, 4294901760
    %v209 = vsub.f32 %v95, %v208
    %210 = vmatmul.f32.gmra.mxu0 %v209
    %v211 = vpop.f32.mrf.mxu0
    %v212 = vadd.f32 %v177, %v211
    %213 = vdwg.mxu0
    %214 = vmatpush.msra.mxu0 0.0
    %215 = vmatpush.msra.mxu0 0.0
    %216 = vmatpush.msra.mxu0 0.0
    %217 = vmatpush.msra.mxu0 0.0
    %218 = vmatpush.msra.mxu0 0.0
    %219 = vmatpush.msra.mxu0 0.0
    %220 = vmatpush.msra.mxu0 0.0
    %221 = vmatpush.msra.mxu0 0.0
    %222 = vmatpush.msra.mxu0 0.0
    %223 = vmatpush.msra.mxu0 0.0
    %224 = vmatpush.msra.mxu0 0.0
    %225 = vmatpush.msra.mxu0 0.0
    %v226 = vand.u32 %v89, 4294901760
    %227 = vmatpush.msra.mxu0 %v226
    %v228 = vand.u32 %v88, 4294901760
    %229 = vmatpush.msra.mxu0 %v228
    %v230 = vand.u32 %v87, 4294901760
    %231 = vmatpush.msra.mxu0 %v230
    %v232 = vand.u32 %v86, 4294901760
    %233 = vmatpush.msra.mxu0 %v232
    %v234 = vand.u32 %v92, 4294901760
    %v235 = vsub.f32 %v92, %v234
    %v236 = vand.u32 %v235, 4294901760
    %237 = vmatmul.f32.gmra.mxu0 %v236
    %v238 = vpop.f32.mrf.mxu0
    %v239 = vadd.f32 %v207, %v238
    %v240 = vand.u32 %v95, 4294901760
    %v241 = vsub.f32 %v95, %v240
    %v242 = vand.u32 %v241, 4294901760
    %243 = vmatmul.f32.gmra.mxu0 %v242
    %v244 = vpop.f32.mrf.mxu0
    %v245 = vadd.f32 %v212, %v244
    %246 = vdwg.mxu0
    %247 = vmatpush.msra.mxu0 0.0
    %248 = vmatpush.msra.mxu0 0.0
    %249 = vmatpush.msra.mxu0 0.0
    %250 = vmatpush.msra.mxu0 0.0
    %251 = vmatpush.msra.mxu0 0.0
    %252 = vmatpush.msra.mxu0 0.0
    %253 = vmatpush.msra.mxu0 0.0
    %254 = vmatpush.msra.mxu0 0.0
    %255 = vmatpush.msra.mxu0 0.0
    %256 = vmatpush.msra.mxu0 0.0
    %257 = vmatpush.msra.mxu0 0.0
    %258 = vmatpush.msra.mxu0 0.0
    %v259 = vand.u32 %v89, 4294901760
    %v260 = vsub.f32 %v89, %v259
    %v261 = vand.u32 %v260, 4294901760
    %262 = vmatpush.msra.mxu0 %v261
    %v263 = vand.u32 %v88, 4294901760
    %v264 = vsub.f32 %v88, %v263
    %v265 = vand.u32 %v264, 4294901760
    %266 = vmatpush.msra.mxu0 %v265
    %v267 = vand.u32 %v87, 4294901760
    %v268 = vsub.f32 %v87, %v267
    %v269 = vand.u32 %v268, 4294901760
    %270 = vmatpush.msra.mxu0 %v269
    %v271 = vand.u32 %v86, 4294901760
    %v272 = vsub.f32 %v86, %v271
    %v273 = vand.u32 %v272, 4294901760
    %274 = vmatpush.msra.mxu0 %v273
    %v275 = vand.u32 %v92, 4294901760
    %276 = vmatmul.f32.gmra.mxu0 %v275
    %v277 = vpop.f32.mrf.mxu0
    %v278 = vadd.f32 %v239, %v277
    %v279 = vand.u32 %v95, 4294901760
    %280 = vmatmul.f32.gmra.mxu0 %v279
    %v281 = vpop.f32.mrf.mxu0
    %v282 = vadd.f32 %v245, %v281
    %283 = vdwg.mxu0
    %284 = vmatpush.msra.mxu0 0.0
    %285 = vmatpush.msra.mxu0 0.0
    %286 = vmatpush.msra.mxu0 0.0
    %287 = vmatpush.msra.mxu0 0.0
    %288 = vmatpush.msra.mxu0 0.0
    %289 = vmatpush.msra.mxu0 0.0
    %290 = vmatpush.msra.mxu0 0.0
    %291 = vmatpush.msra.mxu0 0.0
    %292 = vmatpush.msra.mxu0 0.0
    %293 = vmatpush.msra.mxu0 0.0
    %294 = vmatpush.msra.mxu0 0.0
    %295 = vmatpush.msra.mxu0 0.0
    %v296 = vand.u32 %v89, 4294901760
    %297 = vmatpush.msra.mxu0 %v296
    %v298 = vand.u32 %v88, 4294901760
    %299 = vmatpush.msra.mxu0 %v298
    %v300 = vand.u32 %v87, 4294901760
    %301 = vmatpush.msra.mxu0 %v300
    %v302 = vand.u32 %v86, 4294901760
    %303 = vmatpush.msra.mxu0 %v302
    %v304 = vand.u32 %v92, 4294901760
    %305 = vmatmul.f32.gmra.mxu0 %v304
    %v306 = vpop.f32.mrf.mxu0
    %v307 = vadd.f32 %v278, %v306
    %v308 = vand.u32 %v95, 4294901760
    %309 = vmatmul.f32.gmra.mxu0 %v308
    %v310 = vpop.f32.mrf.mxu0
    %v311 = vadd.f32 %v282, %v310
    %312 = vdwg.mxu0
    %vm313 = vcmp.gt.f32.partialorder %v307, 0.0
    %vm314 = vcmp.gt.f32.partialorder %v311, 0.0
    %v315 = vmul.f32 %v307, 0.01
    %v316 = vmul.f32 %v311, 0.01
    %v317 = vsel %vm313, %v307, %v315
    %v318 = vsel %vm314, %v311, %v316
    %v319 = vsel %vm90, %v317, 0.0
    %320 = vadd.xlane.f32.xlu0 %v319
    %v321 = vpop.xlane.xlu0 %320
    %v322 = vsel %vm90, %v318, 0.0
    %323 = vadd.xlane.f32.xlu0 %v322
    %v324 = vpop.xlane.xlu0 %323
    %v325 = vrcp.pop 32.0
    %v326 = vmul.f32 32.0, %v325
    %v327 = vsub.f32 1.0, %v326
    %v328 = vmul.f32 %v325, %v327
    %v329 = vadd.f32 %v325, %v328
    %vm330 = vweird.f32 %v325
    %v331 = vsel %vm330, %v325, %v329
    %v332 = vmul.f32 %v321, %v331
    %v333 = vmul.f32 %v324, %v331
    %v334 = vmul.f32 %v317, %v317
    %v335 = vmul.f32 %v318, %v318
    %v336 = vsel %vm90, %v334, 0.0
    %337 = vadd.xlane.f32.xlu0 %v336
    %v338 = vpop.xlane.xlu0 %337
    %v339 = vsel %vm90, %v335, 0.0
    %340 = vadd.xlane.f32.xlu0 %v339
    %v341 = vpop.xlane.xlu0 %340
    %v342 = vmul.f32 %v338, %v331
    %v343 = vmul.f32 %v341, %v331
    %v344 = vmul.f32 %v332, %v332
    %v345 = vmul.f32 %v333, %v333
    %v346 = vsub.f32 %v342, %v344
    %v347 = vsub.f32 %v343, %v345
    %v348 = vadd.f32 %v346, 1e-05
    %v349 = vadd.f32 %v347, 1e-05
    %v350 = vrsqrt.pop %v348
    %v351 = vmul.f32 %v350, %v348
    %v352 = vmul.f32 %v351, %v350
    %v353 = vmul.f32 0.5, %v352
    %v354 = vsub.f32 1.5, %v353
    %v355 = vmul.f32 %v350, %v354
    %vm356 = vweird.f32 %v348
    %vm357 = vweird.f32 %v350
    %vm358 = vmor %vm356, %vm357
    %v359 = vsel %vm358, %v350, %v355
    %v360 = vrsqrt.pop %v349
    %v361 = vmul.f32 %v360, %v349
    %v362 = vmul.f32 %v361, %v360
    %v363 = vmul.f32 0.5, %v362
    %v364 = vsub.f32 1.5, %v363
    %v365 = vmul.f32 %v360, %v364
    %vm366 = vweird.f32 %v349
    %vm367 = vweird.f32 %v360
    %vm368 = vmor %vm366, %vm367
    %v369 = vsel %vm368, %v360, %v365
    %v370 = vld [vmem:[#allocation7] sm:$0xff]
    %v371 = vld [vmem:[#allocation7 + $0x8] sm:$0xff]
    %v372 = vld [vmem:[#allocation7 + $0x10] sm:$0xff]
    %v373 = vld [vmem:[#allocation7 + $0x18] sm:$0xff]
    %v375 = vsel %vm90, %v317, 0
    %v378 = vsel %vm90, %v318, 0
    %380 = vmatpush.msra.mxu0 0.0
    %381 = vmatpush.msra.mxu0 0.0
    %382 = vmatpush.msra.mxu0 0.0
    %383 = vmatpush.msra.mxu0 0.0
    %384 = vmatpush.msra.mxu0 0.0
    %385 = vmatpush.msra.mxu0 0.0
    %386 = vmatpush.msra.mxu0 0.0
    %387 = vmatpush.msra.mxu0 0.0
    %388 = vmatpush.msra.mxu0 0.0
    %389 = vmatpush.msra.mxu0 0.0
    %390 = vmatpush.msra.mxu0 0.0
    %391 = vmatpush.msra.mxu0 0.0
    %v392 = vand.u32 %v373, 4294901760
    %393 = vmatpush.msra.mxu0 %v392
    %v394 = vand.u32 %v372, 4294901760
    %395 = vmatpush.msra.mxu0 %v394
    %v396 = vand.u32 %v371, 4294901760
    %397 = vmatpush.msra.mxu0 %v396
    %v398 = vand.u32 %v370, 4294901760
    %399 = vmatpush.msra.mxu0 %v398
    %v400 = vand.u32 %v375, 4294901760
    %v401 = vsub.f32 %v375, %v400
    %v402 = vand.u32 %v401, 4294901760
    %v403 = vsub.f32 %v401, %v402
    %v404 = vand.u32 %v403, 4294901760
    %405 = vmatmul.f32.gmra.mxu0 %v404
    %v406 = vpop.f32.mrf.mxu0
    %v407 = vadd.f32 0.0, %v406
    %v408 = vand.u32 %v378, 4294901760
    %v409 = vsub.f32 %v378, %v408
    %v410 = vand.u32 %v409, 4294901760
    %v411 = vsub.f32 %v409, %v410
    %v412 = vand.u32 %v411, 4294901760
    %413 = vmatmul.f32.gmra.mxu0 %v412
    %v414 = vpop.f32.mrf.mxu0
    %v415 = vadd.f32 0.0, %v414
    %416 = vdwg.mxu0
    %417 = vmatpush.msra.mxu0 0.0
    %418 = vmatpush.msra.mxu0 0.0
    %419 = vmatpush.msra.mxu0 0.0
    %420 = vmatpush.msra.mxu0 0.0
    %421 = vmatpush.msra.mxu0 0.0
    %422 = vmatpush.msra.mxu0 0.0
    %423 = vmatpush.msra.mxu0 0.0
    %424 = vmatpush.msra.mxu0 0.0
    %425 = vmatpush.msra.mxu0 0.0
    %426 = vmatpush.msra.mxu0 0.0
    %427 = vmatpush.msra.mxu0 0.0
    %428 = vmatpush.msra.mxu0 0.0
    %v429 = vand.u32 %v373, 4294901760
    %v430 = vsub.f32 %v373, %v429
    %v431 = vand.u32 %v430, 4294901760
    %v432 = vsub.f32 %v430, %v431
    %v433 = vand.u32 %v432, 4294901760
    %434 = vmatpush.msra.mxu0 %v433
    %v435 = vand.u32 %v372, 4294901760
    %v436 = vsub.f32 %v372, %v435
    %v437 = vand.u32 %v436, 4294901760
    %v438 = vsub.f32 %v436, %v437
    %v439 = vand.u32 %v438, 4294901760
    %440 = vmatpush.msra.mxu0 %v439
    %v441 = vand.u32 %v371, 4294901760
    %v442 = vsub.f32 %v371, %v441
    %v443 = vand.u32 %v442, 4294901760
    %v444 = vsub.f32 %v442, %v443
    %v445 = vand.u32 %v444, 4294901760
    %446 = vmatpush.msra.mxu0 %v445
    %v447 = vand.u32 %v370, 4294901760
    %v448 = vsub.f32 %v370, %v447
    %v449 = vand.u32 %v448, 4294901760
    %v450 = vsub.f32 %v448, %v449
    %v451 = vand.u32 %v450, 4294901760
    %452 = vmatpush.msra.mxu0 %v451
    %v453 = vand.u32 %v375, 4294901760
    %454 = vmatmul.f32.gmra.mxu0 %v453
    %v455 = vpop.f32.mrf.mxu0
    %v456 = vadd.f32 %v407, %v455
    %v457 = vand.u32 %v378, 4294901760
    %458 = vmatmul.f32.gmra.mxu0 %v457
    %v459 = vpop.f32.mrf.mxu0
    %v460 = vadd.f32 %v415, %v459
    %461 = vdwg.mxu0
    %462 = vmatpush.msra.mxu0 0.0
    %463 = vmatpush.msra.mxu0 0.0
    %464 = vmatpush.msra.mxu0 0.0
    %465 = vmatpush.msra.mxu0 0.0
    %466 = vmatpush.msra.mxu0 0.0
    %467 = vmatpush.msra.mxu0 0.0
    %468 = vmatpush.msra.mxu0 0.0
    %469 = vmatpush.msra.mxu0 0.0
    %470 = vmatpush.msra.mxu0 0.0
    %471 = vmatpush.msra.mxu0 0.0
    %472 = vmatpush.msra.mxu0 0.0
    %473 = vmatpush.msra.mxu0 0.0
    %v474 = vand.u32 %v373, 4294901760
    %v475 = vsub.f32 %v373, %v474
    %476 = vmatpush.msra.mxu0 %v475
    %v477 = vand.u32 %v372, 4294901760
    %v478 = vsub.f32 %v372, %v477
    %479 = vmatpush.msra.mxu0 %v478
    %v480 = vand.u32 %v371, 4294901760
    %v481 = vsub.f32 %v371, %v480
    %482 = vmatpush.msra.mxu0 %v481
    %v483 = vand.u32 %v370, 4294901760
    %v484 = vsub.f32 %v370, %v483
    %485 = vmatpush.msra.mxu0 %v484
    %v486 = vand.u32 %v375, 4294901760
    %v487 = vsub.f32 %v375, %v486
    %488 = vmatmul.f32.gmra.mxu0 %v487
    %v489 = vpop.f32.mrf.mxu0
    %v490 = vadd.f32 %v456, %v489
    %v491 = vand.u32 %v378, 4294901760
    %v492 = vsub.f32 %v378, %v491
    %493 = vmatmul.f32.gmra.mxu0 %v492
    %v494 = vpop.f32.mrf.mxu0
    %v495 = vadd.f32 %v460, %v494
    %496 = vdwg.mxu0
    %497 = vmatpush.msra.mxu0 0.0
    %498 = vmatpush.msra.mxu0 0.0
    %499 = vmatpush.msra.mxu0 0.0
    %500 = vmatpush.msra.mxu0 0.0
    %501 = vmatpush.msra.mxu0 0.0
    %502 = vmatpush.msra.mxu0 0.0
    %503 = vmatpush.msra.mxu0 0.0
    %504 = vmatpush.msra.mxu0 0.0
    %505 = vmatpush.msra.mxu0 0.0
    %506 = vmatpush.msra.mxu0 0.0
    %507 = vmatpush.msra.mxu0 0.0
    %508 = vmatpush.msra.mxu0 0.0
    %v509 = vand.u32 %v373, 4294901760
    %510 = vmatpush.msra.mxu0 %v509
    %v511 = vand.u32 %v372, 4294901760
    %512 = vmatpush.msra.mxu0 %v511
    %v513 = vand.u32 %v371, 4294901760
    %514 = vmatpush.msra.mxu0 %v513
    %v515 = vand.u32 %v370, 4294901760
    %516 = vmatpush.msra.mxu0 %v515
    %v517 = vand.u32 %v375, 4294901760
    %v518 = vsub.f32 %v375, %v517
    %v519 = vand.u32 %v518, 4294901760
    %520 = vmatmul.f32.gmra.mxu0 %v519
    %v521 = vpop.f32.mrf.mxu0
    %v522 = vadd.f32 %v490, %v521
    %v523 = vand.u32 %v378, 4294901760
    %v524 = vsub.f32 %v378, %v523
    %v525 = vand.u32 %v524, 4294901760
    %526 = vmatmul.f32.gmra.mxu0 %v525
    %v527 = vpop.f32.mrf.mxu0
    %v528 = vadd.f32 %v495, %v527
    %529 = vdwg.mxu0
    %530 = vmatpush.msra.mxu0 0.0
    %531 = vmatpush.msra.mxu0 0.0
    %532 = vmatpush.msra.mxu0 0.0
    %533 = vmatpush.msra.mxu0 0.0
    %534 = vmatpush.msra.mxu0 0.0
    %535 = vmatpush.msra.mxu0 0.0
    %536 = vmatpush.msra.mxu0 0.0
    %537 = vmatpush.msra.mxu0 0.0
    %538 = vmatpush.msra.mxu0 0.0
    %539 = vmatpush.msra.mxu0 0.0
    %540 = vmatpush.msra.mxu0 0.0
    %541 = vmatpush.msra.mxu0 0.0
    %v542 = vand.u32 %v373, 4294901760
    %v543 = vsub.f32 %v373, %v542
    %v544 = vand.u32 %v543, 4294901760
    %545 = vmatpush.msra.mxu0 %v544
    %v546 = vand.u32 %v372, 4294901760
    %v547 = vsub.f32 %v372, %v546
    %v548 = vand.u32 %v547, 4294901760
    %549 = vmatpush.msra.mxu0 %v548
    %v550 = vand.u32 %v371, 4294901760
    %v551 = vsub.f32 %v371, %v550
    %v552 = vand.u32 %v551, 4294901760
    %553 = vmatpush.msra.mxu0 %v552
    %v554 = vand.u32 %v370, 4294901760
    %v555 = vsub.f32 %v370, %v554
    %v556 = vand.u32 %v555, 4294901760
    %557 = vmatpush.msra.mxu0 %v556
    %v558 = vand.u32 %v375, 4294901760
    %559 = vmatmul.f32.gmra.mxu0 %v558
    %v560 = vpop.f32.mrf.mxu0
    %v561 = vadd.f32 %v522, %v560
    %v562 = vand.u32 %v378, 4294901760
    %563 = vmatmul.f32.gmra.mxu0 %v562
    %v564 = vpop.f32.mrf.mxu0
    %v565 = vadd.f32 %v528, %v564
    %566 = vdwg.mxu0
    %567 = vmatpush.msra.mxu0 0.0
    %568 = vmatpush.msra.mxu0 0.0
    %569 = vmatpush.msra.mxu0 0.0
    %570 = vmatpush.msra.mxu0 0.0
    %571 = vmatpush.msra.mxu0 0.0
    %572 = vmatpush.msra.mxu0 0.0
    %573 = vmatpush.msra.mxu0 0.0
    %574 = vmatpush.msra.mxu0 0.0
    %575 = vmatpush.msra.mxu0 0.0
    %576 = vmatpush.msra.mxu0 0.0
    %577 = vmatpush.msra.mxu0 0.0
    %578 = vmatpush.msra.mxu0 0.0
    %v579 = vand.u32 %v373, 4294901760
    %580 = vmatpush.msra.mxu0 %v579
    %v581 = vand.u32 %v372, 4294901760
    %582 = vmatpush.msra.mxu0 %v581
    %v583 = vand.u32 %v371, 4294901760
    %584 = vmatpush.msra.mxu0 %v583
    %v585 = vand.u32 %v370, 4294901760
    %586 = vmatpush.msra.mxu0 %v585
    %v587 = vand.u32 %v375, 4294901760
    %588 = vmatmul.f32.gmra.mxu0 %v587
    %v589 = vpop.f32.mrf.mxu0
    %v590 = vadd.f32 %v561, %v589
    %v591 = vand.u32 %v378, 4294901760
    %592 = vmatmul.f32.gmra.mxu0 %v591
    %v593 = vpop.f32.mrf.mxu0
    %v594 = vadd.f32 %v565, %v593
    %595 = vdwg.mxu0
    %v596 = vld [vmem:[#allocation8] sm:$0xff]
    %v597 = vld [vmem:[#allocation8 + $0x8] sm:$0xff]
    %v598 = vld [vmem:[#allocation8 + $0x10] sm:$0xff]
    %v599 = vld [vmem:[#allocation8 + $0x18] sm:$0xff]
    %600 = vmatpush.msra.mxu0 0.0
    %601 = vmatpush.msra.mxu0 0.0
    %602 = vmatpush.msra.mxu0 0.0
    %603 = vmatpush.msra.mxu0 0.0
    %604 = vmatpush.msra.mxu0 0.0
    %605 = vmatpush.msra.mxu0 0.0
    %606 = vmatpush.msra.mxu0 0.0
    %607 = vmatpush.msra.mxu0 0.0
    %608 = vmatpush.msra.mxu0 0.0
    %609 = vmatpush.msra.mxu0 0.0
    %610 = vmatpush.msra.mxu0 0.0
    %611 = vmatpush.msra.mxu0 0.0
    %v612 = vand.u32 %v599, 4294901760
    %613 = vmatpush.msra.mxu0 %v612
    %v614 = vand.u32 %v598, 4294901760
    %615 = vmatpush.msra.mxu0 %v614
    %v616 = vand.u32 %v597, 4294901760
    %617 = vmatpush.msra.mxu0 %v616
    %v618 = vand.u32 %v596, 4294901760
    %619 = vmatpush.msra.mxu0 %v618
    %v620 = vand.u32 %v375, 4294901760
    %v621 = vsub.f32 %v375, %v620
    %v622 = vand.u32 %v621, 4294901760
    %v623 = vsub.f32 %v621, %v622
    %v624 = vand.u32 %v623, 4294901760
    %625 = vmatmul.f32.gmra.mxu0 %v624
    %v626 = vpop.f32.mrf.mxu0
    %v627 = vadd.f32 0.0, %v626
    %v628 = vand.u32 %v378, 4294901760
    %v629 = vsub.f32 %v378, %v628
    %v630 = vand.u32 %v629, 4294901760
    %v631 = vsub.f32 %v629, %v630
    %v632 = vand.u32 %v631, 4294901760
    %633 = vmatmul.f32.gmra.mxu0 %v632
    %v634 = vpop.f32.mrf.mxu0
    %v635 = vadd.f32 0.0, %v634
    %636 = vdwg.mxu0
    %637 = vmatpush.msra.mxu0 0.0
    %638 = vmatpush.msra.mxu0 0.0
    %639 = vmatpush.msra.mxu0 0.0
    %640 = vmatpush.msra.mxu0 0.0
    %641 = vmatpush.msra.mxu0 0.0
    %642 = vmatpush.msra.mxu0 0.0
    %643 = vmatpush.msra.mxu0 0.0
    %644 = vmatpush.msra.mxu0 0.0
    %645 = vmatpush.msra.mxu0 0.0
    %646 = vmatpush.msra.mxu0 0.0
    %647 = vmatpush.msra.mxu0 0.0
    %648 = vmatpush.msra.mxu0 0.0
    %v649 = vand.u32 %v599, 4294901760
    %v650 = vsub.f32 %v599, %v649
    %v651 = vand.u32 %v650, 4294901760
    %v652 = vsub.f32 %v650, %v651
    %v653 = vand.u32 %v652, 4294901760
    %654 = vmatpush.msra.mxu0 %v653
    %v655 = vand.u32 %v598, 4294901760
    %v656 = vsub.f32 %v598, %v655
    %v657 = vand.u32 %v656, 4294901760
    %v658 = vsub.f32 %v656, %v657
    %v659 = vand.u32 %v658, 4294901760
    %660 = vmatpush.msra.mxu0 %v659
    %v661 = vand.u32 %v597, 4294901760
    %v662 = vsub.f32 %v597, %v661
    %v663 = vand.u32 %v662, 4294901760
    %v664 = vsub.f32 %v662, %v663
    %v665 = vand.u32 %v664, 4294901760
    %666 = vmatpush.msra.mxu0 %v665
    %v667 = vand.u32 %v596, 4294901760
    %v668 = vsub.f32 %v596, %v667
    %v669 = vand.u32 %v668, 4294901760
    %v670 = vsub.f32 %v668, %v669
    %v671 = vand.u32 %v670, 4294901760
    %672 = vmatpush.msra.mxu0 %v671
    %v673 = vand.u32 %v375, 4294901760
    %674 = vmatmul.f32.gmra.mxu0 %v673
    %v675 = vpop.f32.mrf.mxu0
    %v676 = vadd.f32 %v627, %v675
    %v677 = vand.u32 %v378, 4294901760
    %678 = vmatmul.f32.gmra.mxu0 %v677
    %v679 = vpop.f32.mrf.mxu0
    %v680 = vadd.f32 %v635, %v679
    %681 = vdwg.mxu0
    %682 = vmatpush.msra.mxu0 0.0
    %683 = vmatpush.msra.mxu0 0.0
    %684 = vmatpush.msra.mxu0 0.0
    %685 = vmatpush.msra.mxu0 0.0
    %686 = vmatpush.msra.mxu0 0.0
    %687 = vmatpush.msra.mxu0 0.0
    %688 = vmatpush.msra.mxu0 0.0
    %689 = vmatpush.msra.mxu0 0.0
    %690 = vmatpush.msra.mxu0 0.0
    %691 = vmatpush.msra.mxu0 0.0
    %692 = vmatpush.msra.mxu0 0.0
    %693 = vmatpush.msra.mxu0 0.0
    %v694 = vand.u32 %v599, 4294901760
    %v695 = vsub.f32 %v599, %v694
    %696 = vmatpush.msra.mxu0 %v695
    %v697 = vand.u32 %v598, 4294901760
    %v698 = vsub.f32 %v598, %v697
    %699 = vmatpush.msra.mxu0 %v698
    %v700 = vand.u32 %v597, 4294901760
    %v701 = vsub.f32 %v597, %v700
    %702 = vmatpush.msra.mxu0 %v701
    %v703 = vand.u32 %v596, 4294901760
    %v704 = vsub.f32 %v596, %v703
    %705 = vmatpush.msra.mxu0 %v704
    %v706 = vand.u32 %v375, 4294901760
    %v707 = vsub.f32 %v375, %v706
    %708 = vmatmul.f32.gmra.mxu0 %v707
    %v709 = vpop.f32.mrf.mxu0
    %v710 = vadd.f32 %v676, %v709
    %v711 = vand.u32 %v378, 4294901760
    %v712 = vsub.f32 %v378, %v711
    %713 = vmatmul.f32.gmra.mxu0 %v712
    %v714 = vpop.f32.mrf.mxu0
    %v715 = vadd.f32 %v680, %v714
    %716 = vdwg.mxu0
    %717 = vmatpush.msra.mxu0 0.0
    %718 = vmatpush.msra.mxu0 0.0
    %719 = vmatpush.msra.mxu0 0.0
    %720 = vmatpush.msra.mxu0 0.0
    %721 = vmatpush.msra.mxu0 0.0
    %722 = vmatpush.msra.mxu0 0.0
    %723 = vmatpush.msra.mxu0 0.0
    %724 = vmatpush.msra.mxu0 0.0
    %725 = vmatpush.msra.mxu0 0.0
    %726 = vmatpush.msra.mxu0 0.0
    %727 = vmatpush.msra.mxu0 0.0
    %728 = vmatpush.msra.mxu0 0.0
    %v729 = vand.u32 %v599, 4294901760
    %730 = vmatpush.msra.mxu0 %v729
    %v731 = vand.u32 %v598, 4294901760
    %732 = vmatpush.msra.mxu0 %v731
    %v733 = vand.u32 %v597, 4294901760
    %734 = vmatpush.msra.mxu0 %v733
    %v735 = vand.u32 %v596, 4294901760
    %736 = vmatpush.msra.mxu0 %v735
    %v737 = vand.u32 %v375, 4294901760
    %v738 = vsub.f32 %v375, %v737
    %v739 = vand.u32 %v738, 4294901760
    %740 = vmatmul.f32.gmra.mxu0 %v739
    %v741 = vpop.f32.mrf.mxu0
    %v742 = vadd.f32 %v710, %v741
    %v743 = vand.u32 %v378, 4294901760
    %v744 = vsub.f32 %v378, %v743
    %v745 = vand.u32 %v744, 4294901760
    %746 = vmatmul.f32.gmra.mxu0 %v745
    %v747 = vpop.f32.mrf.mxu0
    %v748 = vadd.f32 %v715, %v747
    %749 = vdwg.mxu0
    %750 = vmatpush.msra.mxu0 0.0
    %751 = vmatpush.msra.mxu0 0.0
    %752 = vmatpush.msra.mxu0 0.0
    %753 = vmatpush.msra.mxu0 0.0
    %754 = vmatpush.msra.mxu0 0.0
    %755 = vmatpush.msra.mxu0 0.0
    %756 = vmatpush.msra.mxu0 0.0
    %757 = vmatpush.msra.mxu0 0.0
    %758 = vmatpush.msra.mxu0 0.0
    %759 = vmatpush.msra.mxu0 0.0
    %760 = vmatpush.msra.mxu0 0.0
    %761 = vmatpush.msra.mxu0 0.0
    %v762 = vand.u32 %v599, 4294901760
    %v763 = vsub.f32 %v599, %v762
    %v764 = vand.u32 %v763, 4294901760
    %765 = vmatpush.msra.mxu0 %v764
    %v766 = vand.u32 %v598, 4294901760
    %v767 = vsub.f32 %v598, %v766
    %v768 = vand.u32 %v767, 4294901760
    %769 = vmatpush.msra.mxu0 %v768
    %v770 = vand.u32 %v597, 4294901760
    %v771 = vsub.f32 %v597, %v770
    %v772 = vand.u32 %v771, 4294901760
    %773 = vmatpush.msra.mxu0 %v772
    %v774 = vand.u32 %v596, 4294901760
    %v775 = vsub.f32 %v596, %v774
    %v776 = vand.u32 %v775, 4294901760
    %777 = vmatpush.msra.mxu0 %v776
    %v778 = vand.u32 %v375, 4294901760
    %779 = vmatmul.f32.gmra.mxu0 %v778
    %v780 = vpop.f32.mrf.mxu0
    %v781 = vadd.f32 %v742, %v780
    %v782 = vand.u32 %v378, 4294901760
    %783 = vmatmul.f32.gmra.mxu0 %v782
    %v784 = vpop.f32.mrf.mxu0
    %v785 = vadd.f32 %v748, %v784
    %786 = vdwg.mxu0
    %787 = vmatpush.msra.mxu0 0.0
    %788 = vmatpush.msra.mxu0 0.0
    %789 = vmatpush.msra.mxu0 0.0
    %790 = vmatpush.msra.mxu0 0.0
    %791 = vmatpush.msra.mxu0 0.0
    %792 = vmatpush.msra.mxu0 0.0
    %793 = vmatpush.msra.mxu0 0.0
    %794 = vmatpush.msra.mxu0 0.0
    %795 = vmatpush.msra.mxu0 0.0
    %796 = vmatpush.msra.mxu0 0.0
    %797 = vmatpush.msra.mxu0 0.0
    %798 = vmatpush.msra.mxu0 0.0
    %v799 = vand.u32 %v599, 4294901760
    %800 = vmatpush.msra.mxu0 %v799
    %v801 = vand.u32 %v598, 4294901760
    %802 = vmatpush.msra.mxu0 %v801
    %v803 = vand.u32 %v597, 4294901760
    %804 = vmatpush.msra.mxu0 %v803
    %v805 = vand.u32 %v596, 4294901760
    %806 = vmatpush.msra.mxu0 %v805
    %v807 = vand.u32 %v375, 4294901760
    %808 = vmatmul.f32.gmra.mxu0 %v807
    %v809 = vpop.f32.mrf.mxu0
    %v810 = vadd.f32 %v781, %v809
    %v811 = vand.u32 %v378, 4294901760
    %812 = vmatmul.f32.gmra.mxu0 %v811
    %v813 = vpop.f32.mrf.mxu0
    %v814 = vadd.f32 %v785, %v813
    %815 = vdwg.mxu0
    %v816 = vmul.f32 %v590, %v359
    %v817 = vmul.f32 %v594, %v369
    %vm818 = vcmp.gt.f32.partialorder %v816, 0.0
    %vm819 = vcmp.gt.f32.partialorder %v817, 0.0
    %v820 = vmul.f32 %v816, 0.01
    %v821 = vmul.f32 %v817, 0.01
    %v822 = vsel %vm818, %v816, %v820
    %v823 = vsel %vm819, %v817, %v821
    %vm824 = vcmask 523264
    %825 = vst.msk [vmem:[#allocation10] sm:$0xff] %vm824, %v822
    %826 = vst.msk [vmem:[#allocation10 + $0x8] sm:$0xff] %vm824, %v823
    %v827 = vmul.f32 %v810, %v359
    %v828 = vmul.f32 %v814, %v369
    %vm829 = vcmp.gt.f32.partialorder %v827, 0.0
    %vm830 = vcmp.gt.f32.partialorder %v828, 0.0
    %v831 = vmul.f32 %v827, 0.01
    %v832 = vmul.f32 %v828, 0.01
    %v833 = vsel %vm829, %v827, %v831
    %v834 = vsel %vm830, %v828, %v832
    %835 = vst.msk [vmem:[#allocation11] sm:$0xff] %vm824, %v833
    %836 = vst.msk [vmem:[#allocation11 + $0x8] sm:$0xff] %vm824, %v834
    // Predicated region
    $region34: #{tpu_custom_call.1} parent=1 // pred_check
      _
    $region35: #{tpu_custom_call.1} parent=1 // pred_check_branch
      %838 = sbr.rel (0) target = $region37
    $region36: #{tpu_custom_call.1} parent=1 // pred_region
      %840 = vsyncadd [#allocation4], 0
      %s841 = sshll.u32 [#allocation10], 4
      %s842 = int_to_ptr.vmem [resolvable:$true] %s841
      %s843 = sshll.u32 %s4, 4
      %s844 = int_to_ptr.hbm [resolvable:$true] %s843
      %849 = dma.vmem_to_hbm [thread:$0]  %s842, 256, %s844, [#allocation4], 128, 128, 8
    $region37: #{tpu_custom_call.1} parent=1 // pred_fallthru
      _
    // Predicated region
    $region38: #{tpu_custom_call.1} parent=1 // pred_check
      _
    $region39: #{tpu_custom_call.1} parent=1 // pred_check_branch
      %851 = sbr.rel (0) target = $region41
    $region40: #{tpu_custom_call.1} parent=1 // pred_region
      %853 = vsyncadd [#allocation12], 0
      %s854 = sshll.u32 [#allocation11], 4
      %s855 = int_to_ptr.vmem [resolvable:$true] %s854
      %s856 = sshll.u32 %s5, 4
      %s857 = int_to_ptr.hbm [resolvable:$true] %s856
      %862 = dma.vmem_to_hbm [thread:$0]  %s855, 256, %s857, [#allocation12], 128, 128, 8
    $region41: #{tpu_custom_call.1} parent=1 // pred_fallthru
      _
    // Predicated region
    $region42: #{tpu_custom_call.1} parent=1 // pred_check
      _
    $region43: #{tpu_custom_call.1} parent=1 // pred_check_branch
      %864 = sbr.rel (0) target = $region45
    $region44: #{tpu_custom_call.1} parent=1 // pred_region
      %866 = dma.done [#allocation4], 256
    $region45: #{tpu_custom_call.1} parent=1 // pred_fallthru
      _
    // Predicated region
    $region46: #{tpu_custom_call.1} parent=1 // pred_check
      _
    $region47: #{tpu_custom_call.1} parent=1 // pred_check_branch
      %868 = sbr.rel (0) target = $region49
    $region48: #{tpu_custom_call.1} parent=1 // pred_region
      %870 = dma.done [#allocation12], 256
    $region49: #{tpu_custom_call.1} parent=1 // pred_fallthru
      _
    %871 = vsyncpa [#allocation3], 1
    %872 = vsyncpa [#allocation6], 1
    %873 = vsyncpa [#allocation9], 1
    %874 = vsyncpa [#allocation4], 1
    %875 = vsyncpa [#allocation12], 1

</llo_original>
